<compile_context>
chip_gen: v6e
topology: v6e:2x2x1
jax: 0.10.0
libtpu: 0.0.40
codegen_flags: <defaults>
</compile_context>

<pallas_src>
import functools
import math

import jax
import jax.numpy as jnp
import numpy as np
from jax.experimental import pallas as pl
from jax.experimental.pallas import tpu as pltpu


def _posrot_kernel(x_ref, pe_ref, ca_ref, sa_ref, o_ref, *, D):
    # x_ref:  (TS, D)   input tile (batch dim squeezed away)
    # pe_ref: (TS, D)   precomputed positional sin/cos rows for this S-tile (f32)
    # ca_ref: (1, D)    tiled cos(angles) (f32)
    # sa_ref: (1, D)    tiled sin(angles) (f32)
    # o_ref:  (TS, 2*D) output tile
    y = x_ref[...].astype(jnp.float32) + pe_ref[...]          # f32 compute (explicit contract)
    ca = ca_ref[...]                                          # (1, D) -> broadcast over rows
    sa = sa_ref[...]
    # Two slice stores instead of a lane-axis concatenate.  Lane-dense and
    # offset-aligned when D % 128 == 0.
    o_ref[:, :D] = (y * ca + sa).astype(o_ref.dtype)          # torch "sin_x"
    o_ref[:, D:] = (y * sa + ca).astype(o_ref.dtype)          # torch "cos_x" (spec multiplies by sin)


def _vmem_budget():
    """Returns (tile_budget_bytes, vmem_limit_bytes) per TPU generation.

    v5e/v6e: 128 MiB physical VMEM -> large tiles amortize the ~0.35 us/step
    pipeline overhead.  v7x: only 64 MiB shared by two live TensorCores ->
    stay conservative.  Unknown chips get the v7x-safe numbers.
    """
    vmem_cap = None
    try:
        vmem_cap = getattr(pltpu.get_tpu_info(), "vmem_capacity_bytes", None)
    except Exception:
        vmem_cap = None
    if vmem_cap is not None and vmem_cap >= 100 * 1024 * 1024:   # v5e / v6e
        return 24 * 1024 * 1024, 64 * 1024 * 1024
    return 12 * 1024 * 1024, 32 * 1024 * 1024                    # v7x / unknown


def _choose_seq_tile(S, D, B, x_itemsize, out_itemsize, budget, row_mult):
    # Double-buffered per-row footprint: x + pe(f32) + out.
    per_row = 2 * (D * x_itemsize + D * 4 + 2 * D * out_itemsize)
    ts = max(row_mult, min(budget // per_row, 2048))
    ts = (ts // row_mult) * row_mult
    ts = int(min(ts, S))
    # v7x megacore: with B == 1 force >= 2 S-tiles so both TensorCores get
    # work (free ~2x there; harmless on single-core chips).
    if B == 1 and S >= 2 * row_mult and pl.cdiv(S, ts) < 2:
        half_rows = -(-S // 2)                                    # ceil(S / 2)
        ts = ((half_rows + row_mult - 1) // row_mult) * row_mult  # round up
        ts = int(min(ts, S))
    return ts


def pos_rot_embedding(x, weights, angles, max_seq_len, *,
                      out_dtype=jnp.float32, seq_tile=None,
                      small_fallback_bytes=1 << 20):
    """PosRotEmbedding forward.

    x: (B, S, D); weights: (D//2,); angles: (D//2,). Returns (B, S, 2*D).
    Compute is always f32; the output is stored in `out_dtype` (default f32,
    matching the torch module; jnp.bfloat16 cuts ~33% of HBM traffic).
    """
    B, S, D = x.shape
    assert D % 2 == 0, "input_dim must be even"
    half = D // 2
    assert weights.shape == (half,) and angles.shape == (half,)
    out_dtype = jnp.dtype(out_dtype)

    # ---- Hoisted constant tables (batch-independent, tiny XLA ops) ----
    # Fold 1/max_seq_len into the weights so table construction has no divide.
    w = weights.astype(jnp.float32) * (1.0 / float(max_seq_len))
    pos = jnp.arange(S, dtype=jnp.float32)
    arg = pos[:, None] * w[None, :]                                    # (S, half)
    pe = jnp.concatenate([jnp.sin(arg), jnp.cos(arg)], axis=-1)        # (S, D) f32
    ca = jnp.tile(jnp.cos(angles.astype(jnp.float32)), 2)[None, :]     # (1, D) f32
    sa = jnp.tile(jnp.sin(angles.astype(jnp.float32)), 2)[None, :]     # (1, D) f32

    # ---- Small-problem fast path: tiny workloads are pure pipeline overhead
    # (fixed per-step cost + narrow masked stores) in a Pallas kernel. ----
    if small_fallback_bytes and x.size * x.dtype.itemsize < small_fallback_bytes:
        y = x.astype(jnp.float32) + pe[None]
        out = jnp.concatenate([y * ca[None] + sa[None],
                               y * sa[None] + ca[None]], axis=-1)
        return out.astype(out_dtype)

    budget, vmem_limit = _vmem_budget()
    row_mult = 16 if min(x.dtype.itemsize, out_dtype.itemsize) < 4 else 8
    if seq_tile is not None:
        ts = int(min(seq_tile, S))
    else:
        ts = _choose_seq_tile(S, D, B, x.dtype.itemsize, out_dtype.itemsize,
                              budget, row_mult)

    grid = (pl.cdiv(S, ts), B)   # S-tiles first; pe stays resident across inner B loop
    kernel = functools.partial(_posrot_kernel, D=D)

    cost = pl.CostEstimate(
        flops=5 * B * S * D,
        transcendentals=0,
        bytes_accessed=(B * S * D * x.dtype.itemsize            # x read
                        + S * D * 4 + 2 * D * 4                 # pe / cos / sin reads
                        + B * S * 2 * D * out_dtype.itemsize),  # out write
    )

    return pl.pallas_call(
        kernel,
        out_shape=jax.ShapeDtypeStruct((B, S, 2 * D), out_dtype),
        grid=grid,
        in_specs=[
            pl.BlockSpec((pl.Squeezed(), ts, D), lambda s, b: (b, s, 0)),   # x tile
            # pe's index_map ignores b -> block is not re-DMA'd across batch steps.
            # TODO(synk): pipeline_mode=pl.Buffered(1) would reclaim pe's idle
            #             second buffer; kept double-buffered for portability.
            pl.BlockSpec((ts, D), lambda s, b: (s, 0)),                     # pe rows
            pl.BlockSpec((1, D), lambda s, b: (0, 0)),                      # cos(angles) tiled
            pl.BlockSpec((1, D), lambda s, b: (0, 0)),                      # sin(angles) tiled
        ],
        out_specs=pl.BlockSpec((pl.Squeezed(), ts, 2 * D), lambda s, b: (b, s, 0)),
        compiler_params=pltpu.CompilerParams(
            dimension_semantics=("parallel", "parallel"),
            vmem_limit_bytes=vmem_limit,
        ),
        cost_estimate=cost,
    )(x, pe, ca, sa)


def _reference(x, weights, angles, max_seq_len):
    # Pure-JAX reference of the same (fixed) semantics.
    B, S, D = x.shape
    pos = jnp.arange(S, dtype=jnp.float32) / max_seq_len
    arg = pos[:, None] * weights.astype(jnp.float32)[None, :]
    pe = jnp.concatenate([jnp.sin(arg), jnp.cos(arg)], axis=-1)
    y = x.astype(jnp.float32) + pe[None]
    ca = jnp.tile(jnp.cos(angles.astype(jnp.float32)), 2)[None, None, :]
    sa = jnp.tile(jnp.sin(angles.astype(jnp.float32)), 2)[None, None, :]
    return jnp.concatenate([y * ca + sa, y * sa + ca], axis=-1)


def _init_params(D):
    # Deterministic parameter init, mirroring the module's __init__.
    half = D // 2
    emb_scale = math.log(10000.0) / (half - 1)
    weights = jnp.exp(jnp.arange(half, dtype=jnp.float32) * -emb_scale)  # PositionalEmbedding.weights
    angles = jnp.zeros((half,), dtype=jnp.float32)                       # RotaryEmbedding.angles
    return weights, angles


if __name__ == "__main__":
    key = jax.random.PRNGKey(0)
    k1, k2 = jax.random.split(key)

    # (a) Spec shapes, Pallas path forced (small-problem fallback disabled).
    B, S, D = 2, 8, 32
    max_seq_len = 128
    weights, angles = _init_params(D)
    x = jax.random.normal(k1, (B, S, D), dtype=jnp.float32)

    out = jax.block_until_ready(
        pos_rot_embedding(x, weights, angles, max_seq_len, small_fallback_bytes=0))
    ref = _reference(x, weights, angles, max_seq_len)
    assert out.shape == (B, S, 2 * D), out.shape
    np.testing.assert_allclose(np.asarray(out), np.asarray(ref), rtol=1e-5, atol=1e-5)

    # (b) Same shapes through the default dispatcher (tiny -> pure-JAX fast path).
    out_fast = jax.block_until_ready(pos_rot_embedding(x, weights, angles, max_seq_len))
    np.testing.assert_allclose(np.asarray(out_fast), np.asarray(ref), rtol=1e-5, atol=1e-5)

    # (c) Lane-dense path (D % 128 == 0), B == 1, and a non-divisible S tile
    #     (partial last block) with non-zero rotary angles.
    B2, S2, D2 = 1, 136, 256
    weights2, _ = _init_params(D2)
    angles2 = 0.1 * jnp.arange(D2 // 2, dtype=jnp.float32)
    x2 = jax.random.normal(k2, (B2, S2, D2), dtype=jnp.float32)
    out2 = jax.block_until_ready(
        pos_rot_embedding(x2, weights2, angles2, 512,
                          small_fallback_bytes=0, seq_tile=64))
    ref2 = _reference(x2, weights2, angles2, 512)
    assert out2.shape == (B2, S2, 2 * D2), out2.shape
    np.testing.assert_allclose(np.asarray(out2), np.asarray(ref2), rtol=1e-5, atol=1e-5)

    print("KERNEL_OK")
</pallas_src>

<mosaic_0001>
module attributes {stable_mosaic.version = 11 : i64} {
  func.func @_posrot_kernel(%arg0: i32, %arg1: i32, %arg2: memref<1x8x32xf32, #tpu.memory_space<vmem>>, %arg3: memref<8x32xf32, #tpu.memory_space<vmem>>, %arg4: memref<1x32xf32, #tpu.memory_space<vmem>>, %arg5: memref<1x32xf32, #tpu.memory_space<vmem>>, %arg6: memref<1x8x64xf32, #tpu.memory_space<vmem>>) attributes {dimension_semantics = [#tpu.dimension_semantics<parallel>, #tpu.dimension_semantics<parallel>], iteration_bounds = array<i64: 1, 2>, scalar_prefetch = 0 : i64, scratch_operands = 0 : i64, tpu.core_type = #tpu.core_type<tc>, window_params = [{transform_indices = @transform_0, window_bounds = array<i64: 1, 8, 32>}, {transform_indices = @transform_1, window_bounds = array<i64: 8, 32>}, {pipeline_mode = #tpu.pipeline_mode<synchronous>, transform_indices = @transform_2, window_bounds = array<i64: 1, 32>}, {pipeline_mode = #tpu.pipeline_mode<synchronous>, transform_indices = @transform_3, window_bounds = array<i64: 1, 32>}, {transform_indices = @transform_4, window_bounds = array<i64: 1, 8, 64>}]} {
    %c0 = arith.constant 0 : index
    %c0_0 = arith.constant 0 : index
    %c0_1 = arith.constant 0 : index
    %0 = vector.load %arg2[%c0, %c0_0, %c0_1] : memref<1x8x32xf32, #tpu.memory_space<vmem>>, vector<1x8x32xf32>
    %1 = vector.shape_cast %0 : vector<1x8x32xf32> to vector<8x32xf32>
    %c0_2 = arith.constant 0 : index
    %c0_3 = arith.constant 0 : index
    %2 = vector.load %arg3[%c0_2, %c0_3] : memref<8x32xf32, #tpu.memory_space<vmem>>, vector<8x32xf32>
    %3 = arith.addf %1, %2 : vector<8x32xf32>
    %c0_4 = arith.constant 0 : index
    %c0_5 = arith.constant 0 : index
    %4 = vector.load %arg4[%c0_4, %c0_5] : memref<1x32xf32, #tpu.memory_space<vmem>>, vector<1x32xf32>
    %c0_6 = arith.constant 0 : index
    %c0_7 = arith.constant 0 : index
    %5 = vector.load %arg5[%c0_6, %c0_7] : memref<1x32xf32, #tpu.memory_space<vmem>>, vector<1x32xf32>
    %6 = vector.broadcast %4 : vector<1x32xf32> to vector<8x32xf32>
    %7 = arith.mulf %3, %6 : vector<8x32xf32>
    %8 = vector.broadcast %5 : vector<1x32xf32> to vector<8x32xf32>
    %9 = arith.addf %7, %8 : vector<8x32xf32>
    %c0_8 = arith.constant 0 : index
    %c0_9 = arith.constant 0 : index
    %c0_10 = arith.constant 0 : index
    %10 = vector.load %arg6[%c0_8, %c0_9, %c0_10] : memref<1x8x64xf32, #tpu.memory_space<vmem>>, vector<1x8x32xf32>
    %11 = vector.shape_cast %10 : vector<1x8x32xf32> to vector<8x32xf32>
    %12 = vector.shape_cast %9 : vector<8x32xf32> to vector<1x8x32xf32>
    tpu.vector_store %arg6[%c0_8, %c0_9, %c0_10], %12 {strides = array<i32>} : memref<1x8x64xf32, #tpu.memory_space<vmem>>, vector<1x8x32xf32>,
    %13 = vector.broadcast %5 : vector<1x32xf32> to vector<8x32xf32>
    %14 = arith.mulf %3, %13 : vector<8x32xf32>
    %15 = vector.broadcast %4 : vector<1x32xf32> to vector<8x32xf32>
    %16 = arith.addf %14, %15 : vector<8x32xf32>
    %c0_11 = arith.constant 0 : index
    %c0_12 = arith.constant 0 : index
    %c32 = arith.constant 32 : index
    %17 = vector.load %arg6[%c0_11, %c0_12, %c32] : memref<1x8x64xf32, #tpu.memory_space<vmem>>, vector<1x8x32xf32>
    %18 = vector.shape_cast %17 : vector<1x8x32xf32> to vector<8x32xf32>
    %19 = vector.shape_cast %16 : vector<8x32xf32> to vector<1x8x32xf32>
    tpu.vector_store %arg6[%c0_11, %c0_12, %c32], %19 {strides = array<i32>} : memref<1x8x64xf32, #tpu.memory_space<vmem>>, vector<1x8x32xf32>,
    return
  }
  func.func @transform_0(%arg0: i32, %arg1: i32) -> (i32, i32, i32) {
    %c0_i32 = arith.constant 0 : i32
    %c0_i32_0 = arith.constant 0 : i32
    return %arg1, %arg0, %c0_i32 : i32, i32, i32
  }
  func.func @transform_1(%arg0: i32, %arg1: i32) -> (i32, i32) {
    %c0_i32 = arith.constant 0 : i32
    %c0_i32_0 = arith.constant 0 : i32
    return %arg0, %c0_i32 : i32, i32
  }
  func.func @transform_2(%arg0: i32, %arg1: i32) -> (i32, i32) {
    %c0_i32 = arith.constant 0 : i32
    %c0_i32_0 = arith.constant 0 : i32
    %c0_i32_1 = arith.constant 0 : i32
    return %c0_i32, %c0_i32_0 : i32, i32
  }
  func.func @transform_3(%arg0: i32, %arg1: i32) -> (i32, i32) {
    %c0_i32 = arith.constant 0 : i32
    %c0_i32_0 = arith.constant 0 : i32
    %c0_i32_1 = arith.constant 0 : i32
    return %c0_i32, %c0_i32_0 : i32, i32
  }
  func.func @transform_4(%arg0: i32, %arg1: i32) -> (i32, i32, i32) {
    %c0_i32 = arith.constant 0 : i32
    %c0_i32_0 = arith.constant 0 : i32
    return %arg1, %arg0, %c0_i32 : i32, i32, i32
  }
}

</mosaic_0001>

<llo_original>
// kernel: tpu_custom_call.1
$region0: #{tpu_custom_call.1}
  #allocation0 [shape = 'u32[]', space=smem, size = 0x4, offset = 0x4, fixed_abs, tag = 'smem constant byte address 0x4 - core index']
  #allocation1 [shape = 'u32[144,128]{1,0:T(1,128)}', space=vmem, size = 0x12000, scoped, tag = 'internal scratch']
  %s0 = inlined_call_operand.hbm [shape: f32[2,8,32], index: 0, kind: input, shape index: {}]
  %s1 = inlined_call_operand.hbm [shape: f32[8,32], index: 1, kind: input, shape index: {}]
  %s2 = inlined_call_operand.vmem [shape: f32[1,32], index: 2, kind: input, shape index: {}]
  %s3 = inlined_call_operand.vmem [shape: f32[1,32], index: 3, kind: input, shape index: {}]
  %s4 = inlined_call_operand.hbm [shape: f32[2,8,64], index: 4, kind: output, shape index: {}]
  %s5 = sld [smem:[#allocation0]]
  $region57: #{tpu_custom_call.1} parent=0
    _
  %s7 = ssub.s32 1, %s5
  %s8 = scalar_select 0, %s7, %s5
  $region1: #{tpu_custom_call.1} parent=0
    #allocation2 [shape = 'u8[8192]{0}', space=vmem, size = 0x2000, scoped, tag = 'input window, operand 0']
    #allocation3 [shape = 's32[2]{0}', space=sflag, size = 0x8, scoped, tag = 'scoped memory for tpu_custom_call.1']
    #allocation4 [shape = 's32[2]{0}', space=sflag, size = 0x8, scoped, tag = 'scoped memory for tpu_custom_call.1']
    #allocation5 [shape = 'u8[4096]{0}', space=vmem, size = 0x1000, scoped, tag = 'input window, operand 1, single buffered']
    #allocation6 [shape = 's32[1]{0}', space=sflag, size = 0x4, scoped, tag = 'scoped memory for tpu_custom_call.1']
    #allocation7 [shape = 'u8[8192]{0}', space=vmem, size = 0x2000, scoped, tag = 'output window, operand 0']
    %9 = vsyncpa [#allocation3], 0
    %s10 = scalar_lea.sflag [#allocation3], 1
    %11 = vsyncpa %s10, 0
    %12 = vsyncpa [#allocation6], 0
    %13 = vsyncpa [#allocation4], 0
    %s14 = scalar_lea.sflag [#allocation4], 1
    %15 = vsyncpa %s14, 0
    loop: start=0, step=1, limit=4
    $region2: #{tpu_custom_call.1} parent=1 // loop_pre_header
      _
    $region3: #{tpu_custom_call.1} parent=1 // loop_header
      %s17 = sphi 0, %s21
      %p18 = scmp.ge.s32.totalorder %s17, 4
      %s24 = sphi 0, %s36
      %s25 = sphi 0, %s32
      %s26 = sphi 0, %s24
      %s27 = sphi 0, %s25
      %s28 = sphi 0, %s26
      %s29 = sphi 0, %s27
      %s41 = sphi 0, %s43
      %s44 = sphi 0, %s41
      %s45 = sphi 0, %s44
      %s61 = sphi 0, %s45
      %s67 = sphi 0, %s69
      %s70 = sphi 0, %s67
      %s71 = sphi 0, %s70
      %s87 = sphi 0, %s71
      %s91 = sphi 0, %s91
      %s93 = sphi 0, %s91
      %s94 = sphi 0, %s93
      %s108 = sphi 0, %s94
      %s112 = sphi 0, %s112
      %s114 = sphi 0, %s112
      %s115 = sphi 0, %s114
      %s129 = sphi 0, %s115
      %s137 = sphi 0, %s139
      %s140 = sphi 0, %s137
      %s141 = sphi 0, %s140
      %s157 = sphi 0, %s141
    $region4: #{tpu_custom_call.1} parent=1 // loop_header_branch
      %20 = sbr.rel (%p18) target = $region8
    $region5: #{tpu_custom_call.1} parent=1 // loop_body
      %s22 = ssub.s32 %s17, 1
      %s23 = ssub.s32 %s17, 2
      %s30 = sadd.s32 1, %s25
      %p31 = scmp.ge.s32.totalorder %s30, 2
      %s32 = scalar_select %p31, 0, %s30
      %s33 = sadd.s32 1, %s24
      %s34 = scalar_select %p31, %s33, %s24
      %p35 = scmp.ge.s32.totalorder %s34, 1
      %s36 = scalar_select %p35, 0, %s34
      %s37 = ssub.s32 %s25, %s32
      %s38 = ssub.s32 %s24, %s36
      %s39 = sor.u32 %s37, %s38
      %p40 = scmp.eq.s32.totalorder %s39, 0
      %s42 = sadd.s32 %s41, 1
      %s43 = scalar_select %p40, %s41, %s42
      %p46 = pneg %p40
      %p47 = scmp.eq.s32.totalorder %s17, 1
      %p48 = por %p46, %p47
      %p49 = scmp.ne.s32.totalorder %s41, %s44
      %p50 = scmp.eq.s32.totalorder %s17, 0
      %p51 = por %p49, %p50
      %p52 = scmp.ne.s32.totalorder %s41, %s44
      %p53 = scmp.eq.s32.totalorder %s22, 1
      %p54 = por %p52, %p53
      %p55 = scmp.ne.s32.totalorder %s44, %s45
      %p56 = scmp.eq.s32.totalorder %s22, 0
      %p57 = por %p55, %p56
      %p58 = scmp.ne.s32.totalorder %s44, %s45
      %p59 = scmp.eq.s32.totalorder %s23, 1
      %p60 = por %p58, %p59
      %p62 = scmp.ne.s32.totalorder %s45, %s61
      %p63 = scmp.eq.s32.totalorder %s23, 0
      %p64 = por %p62, %p63
      %s65 = ssub.s32 %s24, %s36
      %p66 = scmp.eq.s32.totalorder %s65, 0
      %s68 = sadd.s32 %s67, 1
      %s69 = scalar_select %p66, %s67, %s68
      %p72 = pneg %p66
      %p73 = scmp.eq.s32.totalorder %s17, 1
      %p74 = por %p72, %p73
      %p75 = scmp.ne.s32.totalorder %s67, %s70
      %p76 = scmp.eq.s32.totalorder %s17, 0
      %p77 = por %p75, %p76
      %p78 = scmp.ne.s32.totalorder %s67, %s70
      %p79 = scmp.eq.s32.totalorder %s22, 1
      %p80 = por %p78, %p79
      %p81 = scmp.ne.s32.totalorder %s70, %s71
      %p82 = scmp.eq.s32.totalorder %s22, 0
      %p83 = por %p81, %p82
      %p84 = scmp.ne.s32.totalorder %s70, %s71
      %p85 = scmp.eq.s32.totalorder %s23, 1
      %p86 = por %p84, %p85
      %p88 = scmp.ne.s32.totalorder %s71, %s87
      %p89 = scmp.eq.s32.totalorder %s23, 0
      %p90 = por %p88, %p89
      %s92 = sadd.s32 %s91, 1
      %p95 = scmp.eq.s32.totalorder %s17, 1
      %p96 = scmp.ne.s32.totalorder %s91, %s93
      %p97 = scmp.eq.s32.totalorder %s17, 0
      %p98 = por %p96, %p97
      %p99 = scmp.ne.s32.totalorder %s91, %s93
      %p100 = scmp.eq.s32.totalorder %s22, 1
      %p101 = por %p99, %p100
      %p102 = scmp.ne.s32.totalorder %s93, %s94
      %p103 = scmp.eq.s32.totalorder %s22, 0
      %p104 = por %p102, %p103
      %p105 = scmp.ne.s32.totalorder %s93, %s94
      %p106 = scmp.eq.s32.totalorder %s23, 1
      %p107 = por %p105, %p106
      %p109 = scmp.ne.s32.totalorder %s94, %s108
      %p110 = scmp.eq.s32.totalorder %s23, 0
      %p111 = por %p109, %p110
      %s113 = sadd.s32 %s112, 1
      %p116 = scmp.eq.s32.totalorder %s17, 1
      %p117 = scmp.ne.s32.totalorder %s112, %s114
      %p118 = scmp.eq.s32.totalorder %s17, 0
      %p119 = por %p117, %p118
      %p120 = scmp.ne.s32.totalorder %s112, %s114
      %p121 = scmp.eq.s32.totalorder %s22, 1
      %p122 = por %p120, %p121
      %p123 = scmp.ne.s32.totalorder %s114, %s115
      %p124 = scmp.eq.s32.totalorder %s22, 0
      %p125 = por %p123, %p124
      %p126 = scmp.ne.s32.totalorder %s114, %s115
      %p127 = scmp.eq.s32.totalorder %s23, 1
      %p128 = por %p126, %p127
      %p130 = scmp.ne.s32.totalorder %s115, %s129
      %p131 = scmp.eq.s32.totalorder %s23, 0
      %p132 = por %p130, %p131
      %s133 = ssub.s32 %s25, %s32
      %s134 = ssub.s32 %s24, %s36
      %s135 = sor.u32 %s133, %s134
      %p136 = scmp.eq.s32.totalorder %s135, 0
      %s138 = sadd.s32 %s137, 1
      %s139 = scalar_select %p136, %s137, %s138
      %p142 = pneg %p136
      %p143 = scmp.eq.s32.totalorder %s17, 1
      %p144 = por %p142, %p143
      %p145 = scmp.ne.s32.totalorder %s137, %s140
      %p146 = scmp.eq.s32.totalorder %s17, 0
      %p147 = por %p145, %p146
      %p148 = scmp.ne.s32.totalorder %s137, %s140
      %p149 = scmp.eq.s32.totalorder %s22, 1
      %p150 = por %p148, %p149
      %p151 = scmp.ne.s32.totalorder %s140, %s141
      %p152 = scmp.eq.s32.totalorder %s22, 0
      %p153 = por %p151, %p152
      %p154 = scmp.ne.s32.totalorder %s140, %s141
      %p155 = scmp.eq.s32.totalorder %s23, 1
      %p156 = por %p154, %p155
      %p158 = scmp.ne.s32.totalorder %s141, %s157
      %p159 = scmp.eq.s32.totalorder %s23, 0
      %p160 = por %p158, %p159
      %p161 = scmp.le.s32.totalorder 1, %s17
      %p162 = scmp.lt.s32.totalorder %s17, 3
      %p163 = pnand %p161, %p162
      %p164 = pneg %p163
      // Predicated region
      $region9: #{tpu_custom_call.1} parent=5 // pred_check
        _
      $region10: #{tpu_custom_call.1} parent=5 // pred_check_branch
        %166 = sbr.rel (%p163) target = $region12
      $region11: #{tpu_custom_call.1} parent=5 // pred_region
        %s167 = ssub.s32 %s17, 1
        // Predicated region
        $region13: #{tpu_custom_call.1} parent=11 // pred_check
          %p168 = pneg %p83
        $region14: #{tpu_custom_call.1} parent=11 // pred_check_branch
          %170 = sbr.rel (%p168) target = $region16
        $region15: #{tpu_custom_call.1} parent=11 // pred_region
          %s172 = ssub.s32 128, 128
          %173 = vsyncadd [#allocation6], %s172
          %s174 = smul.addr %s26, 128
          %s175 = scalar_lea.hbm %s1, %s174
          %s177 = sshll.u32 [#allocation5], 4
          %s178 = int_to_ptr.vmem [resolvable:$true] %s177
          %180 = dma.hbm_to_vmem [thread:$0]  %s175, 128, %s178, [#allocation6]
        $region16: #{tpu_custom_call.1} parent=11 // pred_fallthru
          _
        // Predicated region
        $region17: #{tpu_custom_call.1} parent=11 // pred_check
          %p181 = pneg %p104
        $region18: #{tpu_custom_call.1} parent=11 // pred_check_branch
          %183 = sbr.rel (%p181) target = $region20
        $region19: #{tpu_custom_call.1} parent=11 // pred_region
          _
        $region20: #{tpu_custom_call.1} parent=11 // pred_fallthru
          _
        // Predicated region
        $region21: #{tpu_custom_call.1} parent=11 // pred_check
          %p184 = pneg %p125
        $region22: #{tpu_custom_call.1} parent=11 // pred_check_branch
          %186 = sbr.rel (%p184) target = $region24
        $region23: #{tpu_custom_call.1} parent=11 // pred_region
          _
        $region24: #{tpu_custom_call.1} parent=11 // pred_fallthru
          _
      $region12: #{tpu_custom_call.1} parent=5 // pred_fallthru
        _
      %p187 = scmp.lt.s32.totalorder %s17, 2
      // Predicated region
      $region25: #{tpu_custom_call.1} parent=5 // pred_check
        %p188 = pneg %p187
      $region26: #{tpu_custom_call.1} parent=5 // pred_check_branch
        %190 = sbr.rel (%p188) target = $region28
      $region27: #{tpu_custom_call.1} parent=5 // pred_region
        // Predicated region
        $region29: #{tpu_custom_call.1} parent=27 // pred_check
          %p191 = pneg %p51
        $region30: #{tpu_custom_call.1} parent=27 // pred_check_branch
          %193 = sbr.rel (%p191) target = $region32
        $region31: #{tpu_custom_call.1} parent=27 // pred_region
          %s194 = sand.u32 %s41, 1
          %s195 = scalar_lea.sflag [#allocation3], %s194
          %s196 = sand.u32 %s41, 1
          %s197 = smul.addr %s196, 8
          %s198 = scalar_lea.vmem [#allocation2], %s197
          %s200 = ssub.s32 128, 128
          %201 = vsyncadd %s195, %s200
          %s202 = sadd.s32 %s24, %s25
          %s203 = smul.addr %s202, 128
          %s204 = scalar_lea.hbm %s0, %s203
          %s206 = sshll.u32 %s198, 4
          %s207 = int_to_ptr.vmem [resolvable:$true] %s206
          %209 = dma.hbm_to_vmem [thread:$0]  %s204, 128, %s207, %s195
        $region32: #{tpu_custom_call.1} parent=27 // pred_fallthru
          _
      $region28: #{tpu_custom_call.1} parent=5 // pred_fallthru
        _
      %p210 = scmp.le.s32.totalorder 1, %s17
      %p211 = scmp.lt.s32.totalorder %s17, 3
      %p212 = pnand %p210, %p211
      %p213 = pneg %p212
      // Predicated region
      $region33: #{tpu_custom_call.1} parent=5 // pred_check
        _
      $region34: #{tpu_custom_call.1} parent=5 // pred_check_branch
        %215 = sbr.rel (%p212) target = $region36
      $region35: #{tpu_custom_call.1} parent=5 // pred_region
        %s216 = ssub.s32 %s17, 1
        %s217 = sand.u32 %s44, 1
        %s218 = scalar_lea.sflag [#allocation3], %s217
        %s219 = sand.u32 %s44, 1
        %s220 = smul.addr %s219, 8
        %s221 = scalar_lea.vmem [#allocation2], %s220
        // Predicated region
        $region37: #{tpu_custom_call.1} parent=35 // pred_check
          %p222 = pneg %p57
        $region38: #{tpu_custom_call.1} parent=35 // pred_check_branch
          %224 = sbr.rel (%p222) target = $region40
        $region39: #{tpu_custom_call.1} parent=35 // pred_region
          %225 = dma.done %s218, 128
        $region40: #{tpu_custom_call.1} parent=35 // pred_fallthru
          _
        // Predicated region
        $region41: #{tpu_custom_call.1} parent=35 // pred_check
          %p226 = pneg %p83
        $region42: #{tpu_custom_call.1} parent=35 // pred_check_branch
          %228 = sbr.rel (%p226) target = $region44
        $region43: #{tpu_custom_call.1} parent=35 // pred_region
          %229 = dma.done [#allocation6], 128
        $region44: #{tpu_custom_call.1} parent=35 // pred_fallthru
          _
        %s230 = sand.u32 %s44, 1
        %s231 = scalar_lea.sflag [#allocation3], %s230
        %s232 = sand.u32 %s44, 1
        %s233 = smul.addr %s232, 8
        %s234 = scalar_lea.vmem [#allocation2], %s233
        %p235 = pneg %p57
        %p236 = pneg %p54
        %p237 = pneg %p83
        %p238 = pneg %p80
        %p239 = pneg %p104
        %p240 = pneg %p101
        %p241 = pneg %p125
        %p242 = pneg %p122
        %p243 = pneg %p153
        %p244 = pneg %p150
        %s245 = sand.u32 %s140, 1
        %s246 = scalar_lea.sflag [#allocation4], %s245
        %s247 = sand.u32 %s140, 1
        %s248 = smul.addr %s247, 8
        %s249 = scalar_lea.vmem [#allocation7], %s248
        %v250 = vld [vmem:[%s221] sm:$0xff]
        %v251 = vld [vmem:[#allocation5] sm:$0xff]
        %v252 = vadd.f32 %v250, %v251
        %v253 = vld [vmem:[%s2] sm:$0x1]
        %v254 = vld [vmem:[%s3] sm:$0x1]
        %v256 = vlaneseq
        %v257 = vshrl.u32 %v256, 7
        %v258 = vsub.s32 0, %v257
        %v259 = vrot.slane %v253, %v258
        %v261 = vmul.f32 %v252, %v259
        %v263 = vlaneseq
        %v264 = vshrl.u32 %v263, 7
        %v265 = vsub.s32 0, %v264
        %v266 = vrot.slane %v254, %v265
        %v268 = vadd.f32 %v261, %v266
        %vm269 = vcmask 261120
        %270 = vst.msk [vmem:[%s249] sm:$0xff] %vm269, %v268
        %v271 = vmul.f32 %v252, %v266
        %v272 = vadd.f32 %v271, %v259
        %274 = vrot.lane.b32.xlu0 %v272, 32
        %v275 = vpop.permute.xlu0 %274
        %vm277 = vcmask 523520
        %278 = vst.msk [vmem:[%s249] sm:$0xff] %vm277, %v275
        %s279 = sand.u32 %s140, 1
        %s280 = scalar_lea.sflag [#allocation4], %s279
        %s281 = sand.u32 %s140, 1
        %s282 = smul.addr %s281, 8
        %s283 = scalar_lea.vmem [#allocation7], %s282
        // Predicated region
        $region45: #{tpu_custom_call.1} parent=35 // pred_check
          %p284 = pneg %p150
        $region46: #{tpu_custom_call.1} parent=35 // pred_check_branch
          %286 = sbr.rel (%p284) target = $region48
        $region47: #{tpu_custom_call.1} parent=35 // pred_region
          %s288 = ssub.s32 128, 128
          %289 = vsyncadd %s280, %s288
          %s290 = sadd.s32 %s26, %s27
          %s291 = smul.addr %s290, 128
          %s292 = scalar_lea.hbm %s4, %s291
          %s294 = sshll.u32 %s283, 4
          %s295 = int_to_ptr.vmem [resolvable:$true] %s294
          %297 = dma.vmem_to_hbm [thread:$0]  %s295, 128, %s292, %s280
        $region48: #{tpu_custom_call.1} parent=35 // pred_fallthru
          _
      $region36: #{tpu_custom_call.1} parent=5 // pred_fallthru
        _
      %p298 = scmp.le.s32.totalorder 2, %s17
      // Predicated region
      $region49: #{tpu_custom_call.1} parent=5 // pred_check
        %p299 = pneg %p298
      $region50: #{tpu_custom_call.1} parent=5 // pred_check_branch
        %301 = sbr.rel (%p299) target = $region52
      $region51: #{tpu_custom_call.1} parent=5 // pred_region
        %s302 = ssub.s32 %s17, 2
        // Predicated region
        $region53: #{tpu_custom_call.1} parent=51 // pred_check
          %p303 = pneg %p156
        $region54: #{tpu_custom_call.1} parent=51 // pred_check_branch
          %305 = sbr.rel (%p303) target = $region56
        $region55: #{tpu_custom_call.1} parent=51 // pred_region
          %s306 = sand.u32 %s141, 1
          %s307 = scalar_lea.sflag [#allocation4], %s306
          %s308 = sand.u32 %s141, 1
          %s309 = smul.addr %s308, 8
          %s310 = scalar_lea.vmem [#allocation7], %s309
          %311 = dma.done %s307, 128
        $region56: #{tpu_custom_call.1} parent=51 // pred_fallthru
          _
      $region52: #{tpu_custom_call.1} parent=5 // pred_fallthru
        _
    $region6: #{tpu_custom_call.1} parent=1 // loop_footer
      %s21 = sadd.s32 1, %s17
    $region7: #{tpu_custom_call.1} parent=1 // loop_footer_branch
      %16 = sbr.rel target = $region3
    $region8: #{tpu_custom_call.1} parent=1 // loop_exit
      _
    %312 = vsyncpa [#allocation3], 1
    %s313 = scalar_lea.sflag [#allocation3], 1
    %314 = vsyncpa %s313, 1
    %315 = vsyncpa [#allocation6], 1
    %316 = vsyncpa [#allocation4], 1
    %s317 = scalar_lea.sflag [#allocation4], 1
    %318 = vsyncpa %s317, 1

</llo_original>
